<compile_context>
chip_gen: v7x
topology: tpu7x:2x2x1
jax: 0.10.0
libtpu: 0.0.40
codegen_flags: <defaults>
</compile_context>

<pallas_src>
import jax
import jax.numpy as jnp
import numpy as np
from jax.experimental import pallas as pl
from jax.experimental.pallas import tpu as pltpu

EPS = 1e-5
LANE = 128

_ROLL_NP_CACHE = {}


def _roll_matches_numpy():
    """One-time tiny device probe: does pltpu.roll use np.roll's shift direction?

    Cached per backend (so a backend switch cannot reuse a stale answer); the result
    is a static Python bool baked into the main kernel.
    """
    backend = jax.default_backend()
    if backend not in _ROLL_NP_CACHE:
        def probe(x_ref, o_ref):
            o_ref[...] = pltpu.roll(x_ref[...], 1, axis=0)

        x = jnp.arange(8 * LANE, dtype=jnp.float32).reshape(8, LANE)
        y = pl.pallas_call(
            probe, out_shape=jax.ShapeDtypeStruct((8, LANE), jnp.float32))(x)
        # np.roll(x, 1, axis=0)[1] == x[0]  ->  y[1, 0] == 0
        _ROLL_NP_CACHE[backend] = bool(np.asarray(y)[1, 0] == 0.0)
    return _ROLL_NP_CACHE[backend]


# --------------------------------------------------------------------------- kernel
def _make_kernel(W, TH, has_downsample, roll_np):
    THP = TH + 2          # rows per block incl. 1-row halo above + below
    P = THP * W           # halo'd spatial positions per block
    TW = TH * W           # output spatial positions per block

    def sh(s):            # pltpu.roll shift implementing np.roll(x, s) semantics
        return s % P if roll_np else (-s) % P

    def kernel(x_ref, halo_ref, w1_ref, b1_ref, w2_ref, b2_ref, wt_ref, bt_ref,
               o_ref):
        r = pl.program_id(1)
        last_r = pl.num_programs(1) - 1

        # Assemble the halo'd activation plane: [row above | block rows | row below].
        x_main = x_ref[0]                                      # (TW, Cin_p) bf16
        halo = halo_ref[0]                                     # (2W, Cin_p) bf16
        x_full = jnp.concatenate([halo[:W], x_main, halo[W:]], axis=0)  # (P, Cin_p)

        # ---- conv1 (1x1, BN1 scale folded into w1) + bias + ReLU ----------------
        h1 = jnp.dot(x_full, w1_ref[...], preferred_element_type=jnp.float32)
        h1 = jnp.maximum(h1 + b1_ref[...], 0.0)                # (P, Cmid_p) f32

        # Halo rows outside the feature map are conv2's zero padding: they must be
        # exactly 0 (not relu(b1)), so zero them on the first / last row block.
        idx = jax.lax.broadcasted_iota(jnp.int32, (P, 1), 0)   # flat halo'd index
        pad_row = jnp.logical_or(
            jnp.logical_and(idx < W, r == 0),
            jnp.logical_and(idx >= (THP - 1) * W, r == last_r))
        h1 = jnp.where(pad_row, 0.0, h1)

        # ---- conv2 (3x3, pad=1, stride=1) ---------------------------------------
        # Column taps (kw = 0, 2) via +-1 rolls (XLU) + column masks; row taps are
        # plain row-offset slices into the halo'd plane (no +-W rolls / row masks).
        col = (idx & (W - 1)) if (W & (W - 1)) == 0 else (idx % W)
        h1_l = jnp.where(col >= 1, pltpu.roll(h1, sh(1), axis=0), 0.0)
        h1_r = jnp.where(col <= W - 2, pltpu.roll(h1, sh(-1), axis=0), 0.0)
        # Pack the 3 column taps along K in bf16 (keeps the big temporary half size).
        cs = jnp.concatenate(
            [h1_l.astype(jnp.bfloat16), h1.astype(jnp.bfloat16),
             h1_r.astype(jnp.bfloat16)], axis=1)               # (P, 3*Cmid_p) bf16

        # Three back-to-back MXU matmuls (K = 3*Cmid_p), f32 accumulation.
        acc = jnp.dot(cs[0:TW], w2_ref[0], preferred_element_type=jnp.float32)
        acc = acc + jnp.dot(cs[W:W + TW], w2_ref[1],
                            preferred_element_type=jnp.float32)
        acc = acc + jnp.dot(cs[2 * W:2 * W + TW], w2_ref[2],
                            preferred_element_type=jnp.float32)
        h2 = jnp.maximum(acc + b2_ref[...], 0.0).astype(jnp.bfloat16)  # (TW, Cmid_p)

        # ---- conv3 (+ fused 1x1 downsample) + bias + residual + ReLU ------------
        if has_downsample:
            tail = jnp.concatenate([h2, x_main], axis=1)       # (TW, Cmid_p + Cin_p)
            out = jnp.dot(tail, wt_ref[...], preferred_element_type=jnp.float32)
            out = out + bt_ref[...]                            # bt = b3 + bd
        else:  # identity shortcut (Cin == Cout); residual added in f32
            out = jnp.dot(h2, wt_ref[...], preferred_element_type=jnp.float32)
            out = out + bt_ref[...] + x_main.astype(jnp.float32)
        o_ref[0] = jnp.maximum(out, 0.0).astype(o_ref.dtype)

    return kernel


# --------------------------------------------------------------------------- helpers
def _ceil_to(x, m):
    return (x + m - 1) // m * m


def _pad_axis(a, axis, target):
    pad = target - a.shape[axis]
    if pad == 0:
        return a
    widths = [(0, 0)] * a.ndim
    widths[axis] = (0, pad)
    return jnp.pad(a, widths)


def _fold_bn(gamma, beta, mean, var):
    scale = gamma / jnp.sqrt(var + EPS)
    return scale, beta - mean * scale


def fold_params(p, has_downsample=True):
    """Fold inference BN into conv weights, pad channels to the 128-lane boundary and
    cast matmul operands to bf16.  Constant per inference graph -- hoist/cache this
    instead of redoing it per call when chaining blocks."""
    Cmid, Cin = p["w1"].shape[:2]
    Cout = p["w3"].shape[0]
    Cin_p, Cmid_p, Cout_p = (_ceil_to(c, LANE) for c in (Cin, Cmid, Cout))

    s1, b1 = _fold_bn(p["g1"], p["be1"], p["m1"], p["v1"])
    s2, b2 = _fold_bn(p["g2"], p["be2"], p["m2"], p["v2"])
    s3, b3 = _fold_bn(p["g3"], p["be3"], p["m3"], p["v3"])

    # conv1: (Cmid, Cin, 1, 1) -> (Cin_p, Cmid_p), BN1 scale folded per out column.
    w1 = p["w1"][:, :, 0, 0].T * s1[None, :]
    w1 = _pad_axis(_pad_axis(w1, 0, Cin_p), 1, Cmid_p).astype(jnp.bfloat16)
    b1p = _pad_axis(b1[None, :], 1, Cmid_p).astype(jnp.float32)

    # conv2: (Cmid, Cmid, 3, 3) -> (kh, 3*Cmid_p, Cmid_p); BN2 scale folded; the 3
    # column taps (kw) of each kernel row packed along K (pad per-tap, THEN reshape).
    w2 = jnp.transpose(p["w2"], (2, 3, 1, 0)) * s2[None, None, None, :]
    w2 = _pad_axis(_pad_axis(w2, 2, Cmid_p), 3, Cmid_p)
    w2p = w2.reshape(3, 3 * Cmid_p, Cmid_p).astype(jnp.bfloat16)
    b2p = _pad_axis(b2[None, :], 1, Cmid_p).astype(jnp.float32)

    # conv3 (+ downsample) fused into one (Cmid_p [+ Cin_p], Cout_p) matmul.
    w3 = p["w3"][:, :, 0, 0].T * s3[None, :]
    w3 = _pad_axis(_pad_axis(w3, 0, Cmid_p), 1, Cout_p)
    if has_downsample:
        sd, bd = _fold_bn(p["gd"], p["bed"], p["md"], p["vd"])
        wd = p["wd"][:, :, 0, 0].T * sd[None, :]
        wd = _pad_axis(_pad_axis(wd, 0, Cin_p), 1, Cout_p)
        wt = jnp.concatenate([w3, wd], axis=0).astype(jnp.bfloat16)
        bt = _pad_axis((b3 + bd)[None, :], 1, Cout_p).astype(jnp.float32)
    else:
        wt = w3.astype(jnp.bfloat16)
        bt = _pad_axis(b3[None, :], 1, Cout_p).astype(jnp.float32)

    return dict(w1=w1, b1=b1p, w2=w2p, b2=b2p, wt=wt, bt=bt,
                Cin=Cin, Cmid=Cmid, Cout=Cout,
                Cin_p=Cin_p, Cmid_p=Cmid_p, Cout_p=Cout_p)


def _choose_row_block(H, W, row_block=None):
    if row_block is not None:
        assert H % row_block == 0, "row_block must divide H"
        assert (row_block * W) % 8 == 0 or row_block == H, \
            "row_block*W must be a multiple of 8"
        return row_block
    # Largest divisor of H keeping the tile <= ~4K spatial positions (bounds the
    # per-step VMEM working set) with an (8,128)-friendly sublane count.
    best = H
    for th in range(1, H + 1):
        if H % th == 0 and (th * W) % 8 == 0 and th * W <= 4096:
            best = th
    return best


# --------------------------------------------------------------------------- wrapper
def _bottleneck_flat(x_flat, halo, fp, H, W, TH, has_downsample):
    """x_flat: (N, H*W, Cin_p) bf16 channels-last; halo: (N, NR*2*W, Cin_p) bf16.
    Returns (N, H*W, Cout_p) bf16."""
    N = x_flat.shape[0]
    NR = H // TH
    TW, P = TH * W, (TH + 2) * W
    Cin_p, Cmid_p, Cout_p = fp["Cin_p"], fp["Cmid_p"], fp["Cout_p"]

    kernel = _make_kernel(W, TH, has_downsample, _roll_matches_numpy())

    def full_spec(a):
        zeros = (0,) * a.ndim
        return pl.BlockSpec(a.shape, lambda n, r: zeros)

    # VMEM budget from the tiled working set (double-buffered IO + weights + temps).
    w_bytes = sum(fp[k].size * fp[k].dtype.itemsize
                  for k in ("w1", "b1", "w2", "b2", "wt", "bt"))
    io_bytes = 2 * ((TW + 2 * W) * Cin_p * 2 + TW * Cout_p * 2)
    tmp_bytes = (P * Cin_p * 2                    # x_full concat (bf16)
                 + 3 * P * Cmid_p * 4             # h1, h1_l, h1_r (f32)
                 + P * 3 * Cmid_p * 2             # cs (bf16)
                 + TW * Cmid_p * 6                # acc (f32) + h2 (bf16)
                 + TW * (Cmid_p + Cin_p) * 2      # tail concat (bf16)
                 + TW * Cout_p * 4)               # out (f32)
    est = 2 * w_bytes + io_bytes + 2 * tmp_bytes
    try:
        vmem_cap = int(pltpu.get_tpu_info().vmem_capacity_bytes * 0.9)
    except Exception:  # fall back to a cap that is safe on every TPU generation
        vmem_cap = 48 * 2 ** 20
    vmem_limit = int(min(max(2 * est, 32 * 2 ** 20), max(vmem_cap, 32 * 2 ** 20)))

    return pl.pallas_call(
        kernel,
        out_shape=jax.ShapeDtypeStruct((N, H * W, Cout_p), jnp.bfloat16),
        grid_spec=pltpu.PrefetchScalarGridSpec(
            num_scalar_prefetch=0,
            grid=(N, NR),
            in_specs=[
                pl.BlockSpec((1, TW, Cin_p), lambda n, r: (n, r, 0)),
                pl.BlockSpec((1, 2 * W, Cin_p), lambda n, r: (n, r, 0)),
                full_spec(fp["w1"]), full_spec(fp["b1"]),
                full_spec(fp["w2"]), full_spec(fp["b2"]),
                full_spec(fp["wt"]), full_spec(fp["bt"]),
            ],
            out_specs=pl.BlockSpec((1, TW, Cout_p), lambda n, r: (n, r, 0)),
        ),
        compiler_params=pltpu.CompilerParams(
            dimension_semantics=("parallel", "parallel"),
            vmem_limit_bytes=vmem_limit),
    )(x_flat, halo, fp["w1"], fp["b1"], fp["w2"], fp["b2"], fp["wt"], fp["bt"])


def residual_bottleneck_block(x_nchw, p, has_downsample=True, row_block=None,
                              folded=None):
    """NCHW f32 in/out convenience wrapper matching the PyTorch module (stride=1).

    When chaining blocks, pre-fold the weights once with fold_params() (pass via
    `folded=`) and keep activations channels-last bf16 between blocks to avoid the
    per-call transpose/pad/cast round trips.
    """
    N, Cin, H, W = x_nchw.shape
    fp = folded if folded is not None else fold_params(p, has_downsample)
    assert Cin == fp["Cin"], "param/input channel mismatch"
    if not has_downsample:
        assert fp["Cin"] == fp["Cout"], "identity shortcut requires Cin == Cout"

    TH = _choose_row_block(H, W, row_block)
    NR = H // TH
    Cin_p = fp["Cin_p"]

    # activations: NCHW -> channels-last (N, H, W, Cin_p) bf16, C on the lane axis.
    x_nhwc = _pad_axis(jnp.transpose(x_nchw, (0, 2, 3, 1)), 3, Cin_p)
    x_nhwc = x_nhwc.astype(jnp.bfloat16)
    x_flat = x_nhwc.reshape(N, H * W, Cin_p)

    # Halo rows per row block (the row just above / below each block; zeros at the
    # feature-map border), gathered once in the host graph: (N, NR*2*W, Cin_p).
    zrow = jnp.zeros((N, 1, W, Cin_p), jnp.bfloat16)
    if NR > 1:
        top = jnp.concatenate([zrow, x_nhwc[:, TH - 1::TH][:, :NR - 1]], axis=1)
        bot = jnp.concatenate([x_nhwc[:, TH::TH][:, :NR - 1], zrow], axis=1)
    else:
        top, bot = zrow, zrow
    halo = jnp.concatenate([top, bot], axis=2).reshape(N, NR * 2 * W, Cin_p)

    out = _bottleneck_flat(x_flat, halo, fp, H, W, TH, has_downsample)

    out = out[:, :, :fp["Cout"]].reshape(N, H, W, fp["Cout"])
    return jnp.transpose(out, (0, 3, 1, 2)).astype(x_nchw.dtype)   # back to NCHW


# ------------------------------ reference (pure JAX, NCHW like PyTorch) -------------
def _conv2d(x, w, stride=1, padding=0):
    return jax.lax.conv_general_dilated(
        x, w, (stride, stride), [(padding, padding)] * 2,
        dimension_numbers=("NCHW", "OIHW", "NCHW"))


def _bn(x, gamma, beta, mean, var):
    s = (1, -1, 1, 1)
    return (x - mean.reshape(s)) / jnp.sqrt(var.reshape(s) + EPS) \
        * gamma.reshape(s) + beta.reshape(s)


def reference(x, p, has_downsample=True):
    h = jnp.maximum(_bn(_conv2d(x, p["w1"]), p["g1"], p["be1"], p["m1"], p["v1"]), 0.0)
    h = jnp.maximum(_bn(_conv2d(h, p["w2"], 1, 1), p["g2"], p["be2"], p["m2"], p["v2"]), 0.0)
    h = _bn(_conv2d(h, p["w3"]), p["g3"], p["be3"], p["m3"], p["v3"])
    sc = _bn(_conv2d(x, p["wd"]), p["gd"], p["bed"], p["md"], p["vd"]) if has_downsample else x
    return jnp.maximum(h + sc, 0.0)


def make_params(key, n_in, n_out, expansion=4):
    c_out = n_out * expansion
    ks = jax.random.split(key, 16)
    rn = lambda k, s: (0.1 * jax.random.normal(k, s)).astype(jnp.float32)
    bn = lambda k, c: dict(zip(("g", "be", "m", "v"),
                               (1.0 + rn(k, (c,)),
                                rn(jax.random.fold_in(k, 1), (c,)),
                                rn(jax.random.fold_in(k, 2), (c,)),
                                0.5 + jnp.abs(rn(jax.random.fold_in(k, 3), (c,))))))
    p = {
        "w1": rn(ks[0], (n_out, n_in, 1, 1)),
        "w2": rn(ks[1], (n_out, n_out, 3, 3)),
        "w3": rn(ks[2], (c_out, n_out, 1, 1)),
        "wd": rn(ks[3], (c_out, n_in, 1, 1)),
    }
    for name, k, c in (("1", ks[4], n_out), ("2", ks[5], n_out),
                       ("3", ks[6], c_out), ("d", ks[7], c_out)):
        for stat, val in bn(k, c).items():
            p[stat + name] = val
    return p


if __name__ == "__main__":
    key = jax.random.PRNGKey(0)
    k1, k2, k3, k4 = jax.random.split(key, 4)
    N, H, W = 2, 16, 16

    # Config A: projection (downsample) shortcut, Cin != Cout.  row_block=8 exercises
    # the spatial grid axis (grid = (N, 2)).  x: (2, 4, 16, 16)
    xa = jax.random.normal(k1, (N, 4, H, W), dtype=jnp.float32)
    pa = make_params(k2, 4, 4)
    outa = jax.block_until_ready(
        residual_bottleneck_block(xa, pa, has_downsample=True, row_block=8))
    refa = jax.block_until_ready(reference(xa, pa, True))
    assert outa.shape == (N, 16, H, W), outa.shape
    # bf16 matmul operands + bf16 output store -> relaxed tolerance vs f32 reference.
    np.testing.assert_allclose(np.asarray(outa), np.asarray(refa), rtol=3e-2, atol=3e-2)

    # Config B: identity shortcut (downsample=None, Cin == Cout), single row block.
    xb = jax.random.normal(k3, (N, 16, H, W), dtype=jnp.float32)
    pb = make_params(k4, 16, 4)
    outb = jax.block_until_ready(
        residual_bottleneck_block(xb, pb, has_downsample=False))
    refb = jax.block_until_ready(reference(xb, pb, False))
    assert outb.shape == (N, 16, H, W), outb.shape
    np.testing.assert_allclose(np.asarray(outb), np.asarray(refb), rtol=3e-2, atol=3e-2)

    print("KERNEL_OK")
</pallas_src>

<mosaic_0001>
module attributes {stable_mosaic.version = 11 : i64} {
  func.func @probe(%arg0: memref<8x128xf32, #tpu.memory_space<vmem>>, %arg1: memref<8x128xf32, #tpu.memory_space<vmem>>) attributes {dimension_semantics = [], scalar_prefetch = 0 : i64, scratch_operands = 0 : i64, tpu.core_type = #tpu.core_type<tc>} {
    %c0 = arith.constant 0 : index
    %c0_0 = arith.constant 0 : index
    %0 = vector.load %arg0[%c0, %c0_0] : memref<8x128xf32, #tpu.memory_space<vmem>>, vector<8x128xf32>
    %c1_i32 = arith.constant 1 : i32
    %1 = tpu.dynamic_rotate %0 by %c1_i32 dim 0 : vector<8x128xf32>, i32 -> vector<8x128xf32>
    %c0_1 = arith.constant 0 : index
    %c0_2 = arith.constant 0 : index
    %2 = vector.load %arg1[%c0_1, %c0_2] : memref<8x128xf32, #tpu.memory_space<vmem>>, vector<8x128xf32>
    tpu.vector_store %arg1[%c0_1, %c0_2], %1 {strides = array<i32>} : memref<8x128xf32, #tpu.memory_space<vmem>>, vector<8x128xf32>,
    return
  }
}

</mosaic_0001>

<llo_original>
// kernel: tpu_custom_call.1
$region0: #{tpu_custom_call.1}
  #allocation0 [shape = 'u32[]', space=smem, size = 0x4, offset = 0x4, fixed_abs, tag = 'smem constant byte address 0x4 - core index']
  #allocation1 [shape = 'u32[144,128]{1,0:T(1,128)}', space=vmem, size = 0x12000, scoped, tag = 'internal scratch']
  %s0 = inlined_call_operand.hbm [shape: f32[8,128], index: 0, kind: input, shape index: {}]
  %s1 = inlined_call_operand.hbm [shape: f32[8,128], index: 1, kind: output, shape index: {}]
  %s2 = sld [smem:[#allocation0]]
  $region18: #{tpu_custom_call.1} parent=0
    _
  %s4 = ssub.s32 1, %s2
  %s5 = scalar_select 0, %s4, %s2
  $region1: #{tpu_custom_call.1} parent=0
    #allocation2 [shape = 'u8[4096]{0}', space=vmem, size = 0x1000, scoped, tag = 'input window, operand 0, single buffered']
    #allocation3 [shape = 's32[1]{0}', space=sflag, size = 0x4, scoped, tag = 'scoped memory for tpu_custom_call.1']
    #allocation4 [shape = 's32[1]{0}', space=sflag, size = 0x4, scoped, tag = 'scoped memory for tpu_custom_call.1']
    #allocation5 [shape = 'u8[4096]{0}', space=vmem, size = 0x1000, scoped, tag = 'output window, operand 0, single buffered']
    %6 = vsyncpa [#allocation3], 0
    %7 = vsyncpa [#allocation4], 0
    // Predicated region
    $region2: #{tpu_custom_call.1} parent=1 // pred_check
      _
    $region3: #{tpu_custom_call.1} parent=1 // pred_check_branch
      %9 = sbr.rel (0) target = $region5
    $region4: #{tpu_custom_call.1} parent=1 // pred_region
      %s11 = ssub.s32 128, 128
      %12 = vsyncadd [#allocation3], %s11
      %s14 = sshll.u32 [#allocation2], 4
      %s15 = int_to_ptr.vmem [resolvable:$true] %s14
      %17 = dma.hbm_to_vmem [thread:$0]  %s0, 128, %s15, [#allocation3]
    $region5: #{tpu_custom_call.1} parent=1 // pred_fallthru
      _
    // Predicated region
    $region6: #{tpu_custom_call.1} parent=1 // pred_check
      _
    $region7: #{tpu_custom_call.1} parent=1 // pred_check_branch
      %19 = sbr.rel (0) target = $region9
    $region8: #{tpu_custom_call.1} parent=1 // pred_region
      %20 = dma.done [#allocation3], 128
    $region9: #{tpu_custom_call.1} parent=1 // pred_fallthru
      _
    %v21 = vld [vmem:[#allocation2] sm:$0xff]
    %v22 = vrot.slane %v21, 7
    %23 = vst [vmem:[#allocation5] sm:$0xff] %v22
    // Predicated region
    $region10: #{tpu_custom_call.1} parent=1 // pred_check
      _
    $region11: #{tpu_custom_call.1} parent=1 // pred_check_branch
      %25 = sbr.rel (0) target = $region13
    $region12: #{tpu_custom_call.1} parent=1 // pred_region
      %s27 = ssub.s32 128, 128
      %28 = vsyncadd [#allocation4], %s27
      %s30 = sshll.u32 [#allocation5], 4
      %s31 = int_to_ptr.vmem [resolvable:$true] %s30
      %33 = dma.vmem_to_hbm [thread:$0]  %s31, 128, %s1, [#allocation4]
    $region13: #{tpu_custom_call.1} parent=1 // pred_fallthru
      _
    // Predicated region
    $region14: #{tpu_custom_call.1} parent=1 // pred_check
      _
    $region15: #{tpu_custom_call.1} parent=1 // pred_check_branch
      %35 = sbr.rel (0) target = $region17
    $region16: #{tpu_custom_call.1} parent=1 // pred_region
      %36 = dma.done [#allocation4], 128
    $region17: #{tpu_custom_call.1} parent=1 // pred_fallthru
      _
    %37 = vsyncpa [#allocation3], 1
    %38 = vsyncpa [#allocation4], 1

</llo_original>
